<compile_context>
chip_gen: v7x
topology: tpu7x:2x2x1
jax: 0.10.0
libtpu: 0.0.40
codegen_flags: <defaults>
</compile_context>

<pallas_src>
import functools

import jax
import jax.numpy as jnp
from jax.experimental import pallas as pl
from jax.experimental.pallas import tpu as pltpu

_LANE = 128
_SUBLANE = 8


def _round_up(x: int, m: int) -> int:
    return ((x + m - 1) // m) * m


def _mlp_critic_kernel(x_ref, w1_ref, b1_ref, w2_ref, b2_ref, w3_ref, b3_ref,
                       o_ref):
    """One batch tile: 3 MXU matmuls (bf16 in, f32 acc) + f32 bias/tanh epilogues."""
    x = x_ref[...]                                                   # (tb, in_dim) bf16

    h1 = jnp.dot(x, w1_ref[...], preferred_element_type=jnp.float32)
    h1 = jnp.tanh(h1 + b1_ref[...])                                  # f32 epilogue

    h2 = jnp.dot(h1.astype(w2_ref.dtype), w2_ref[...],
                 preferred_element_type=jnp.float32)
    h2 = jnp.tanh(h2 + b2_ref[...])                                  # f32 epilogue

    out = jnp.dot(h2.astype(w3_ref.dtype), w3_ref[...],
                  preferred_element_type=jnp.float32) + b3_ref[...]
    o_ref[...] = out.astype(o_ref.dtype)                             # lane-dense store


@functools.partial(jax.jit, static_argnames=("tile_b",))
def feedforward_critic(obs, w1, b1, w2, b2, w3, b3, *, tile_b=256):
    """Pallas-backed forward pass of FeedForwardNN_critic.

    obs: (B, in_dim) float32
    w1: (in_dim, H), b1: (H,)    (weights are transposed vs. PyTorch Linear)
    w2: (H, H),      b2: (H,)
    w3: (H, out),    b3: (out,)
    returns: (B, out) float32
    """
    B, in_dim = obs.shape
    H = w1.shape[1]
    out_dim = w3.shape[1]

    # Lane-pad hidden and output dims; sublane-pad / tile the batch dim.
    H_pad = _round_up(H, _LANE)
    out_pad = _round_up(out_dim, _LANE)
    tb = _round_up(min(tile_b, _round_up(B, _SUBLANE)), _SUBLANE)
    B_pad = _round_up(B, tb)

    f32, bf16 = jnp.float32, jnp.bfloat16
    obs_p = jnp.pad(obs, ((0, B_pad - B), (0, 0))).astype(bf16)
    w1_p = jnp.pad(w1, ((0, 0), (0, H_pad - H))).astype(bf16)
    w2_p = jnp.pad(w2, ((0, H_pad - H), (0, H_pad - H))).astype(bf16)
    w3_p = jnp.pad(w3, ((0, H_pad - H), (0, out_pad - out_dim))).astype(bf16)
    b1_p = jnp.pad(b1.reshape(1, -1), ((0, 0), (0, H_pad - H))).astype(f32)
    b2_p = jnp.pad(b2.reshape(1, -1), ((0, 0), (0, H_pad - H))).astype(f32)
    b3_p = jnp.pad(b3.reshape(1, -1), ((0, 0), (0, out_pad - out_dim))).astype(f32)

    grid = (B_pad // tb,)

    flops = 2 * B_pad * (in_dim * H_pad + H_pad * H_pad + H_pad * out_pad)
    transcendentals = 2 * B_pad * H_pad
    bytes_accessed = sum(int(a.size) * a.dtype.itemsize
                         for a in (obs_p, w1_p, w2_p, w3_p, b1_p, b2_p, b3_p))
    bytes_accessed += B_pad * out_pad * 4

    batch_spec = lambda shape: pl.BlockSpec(shape, lambda i: (i, 0))
    resident_spec = lambda shape: pl.BlockSpec(shape, lambda i: (0, 0))

    out_padded = pl.pallas_call(
        _mlp_critic_kernel,
        out_shape=jax.ShapeDtypeStruct((B_pad, out_pad), jnp.float32),
        grid=grid,
        in_specs=[
            batch_spec((tb, in_dim)),            # obs: pipelined over batch
            resident_spec((in_dim, H_pad)),      # weights/biases: VMEM-resident
            resident_spec((1, H_pad)),
            resident_spec((H_pad, H_pad)),
            resident_spec((1, H_pad)),
            resident_spec((H_pad, out_pad)),
            resident_spec((1, out_pad)),
        ],
        out_specs=batch_spec((tb, out_pad)),
        compiler_params=pltpu.CompilerParams(
            dimension_semantics=("parallel",)),  # 2 TCs on v7x; no-op on v5e/v6e
        cost_estimate=pl.CostEstimate(
            flops=flops,
            transcendentals=transcendentals,
            bytes_accessed=bytes_accessed),
    )(obs_p, w1_p, b1_p, w2_p, b2_p, w3_p, b3_p)

    # Strip batch padding and the lane padding of the output dim.
    return out_padded[:B, :out_dim]


def init_params(key, in_dim, out_dim, n_latent_var):
    """PyTorch nn.Linear-style init: U(-1/sqrt(fan_in), +1/sqrt(fan_in))."""
    def linear(key, fan_in, fan_out):
        kw, kb = jax.random.split(key)
        bound = 1.0 / jnp.sqrt(jnp.float32(fan_in))
        w = jax.random.uniform(kw, (fan_in, fan_out), jnp.float32, -bound, bound)
        b = jax.random.uniform(kb, (fan_out,), jnp.float32, -bound, bound)
        return w, b

    k1, k2, k3 = jax.random.split(key, 3)
    w1, b1 = linear(k1, in_dim, n_latent_var)
    w2, b2 = linear(k2, n_latent_var, n_latent_var)
    w3, b3 = linear(k3, n_latent_var, out_dim)
    return w1, b1, w2, b2, w3, b3


def _reference(obs, w1, b1, w2, b2, w3, b3):
    h = jnp.tanh(obs @ w1 + b1)
    h = jnp.tanh(h @ w2 + b2)
    return h @ w3 + b3


if __name__ == "__main__":
    in_dim, out_dim, n_latent_var = 16, 1, 32

    key = jax.random.PRNGKey(0)
    k_params, k_obs1, k_obs2 = jax.random.split(key, 3)
    params = init_params(k_params, in_dim, out_dim, n_latent_var)

    # Small batch: single grid step.
    batch = 8
    obs = jax.random.normal(k_obs1, (batch, in_dim), dtype=jnp.float32)
    out = jax.block_until_ready(feedforward_critic(obs, *params))
    ref = _reference(obs, *params)
    assert out.shape == (batch, out_dim)
    # bf16 MXU inputs -> relaxed tolerance vs. the f32 reference.
    assert jnp.allclose(out, ref, atol=5e-2, rtol=5e-2), \
        float(jnp.max(jnp.abs(out - ref)))

    # Larger, non-multiple batch: exercises multi-step grid + batch padding.
    batch2 = 300
    obs2 = jax.random.normal(k_obs2, (batch2, in_dim), dtype=jnp.float32)
    out2 = jax.block_until_ready(feedforward_critic(obs2, *params, tile_b=64))
    ref2 = _reference(obs2, *params)
    assert out2.shape == (batch2, out_dim)
    assert jnp.allclose(out2, ref2, atol=5e-2, rtol=5e-2), \
        float(jnp.max(jnp.abs(out2 - ref2)))

    print("KERNEL_OK")
</pallas_src>

<mosaic_0001>
module attributes {stable_mosaic.version = 11 : i64} {
  func.func @_mlp_critic_kernel(%arg0: i32, %arg1: memref<8x16xbf16, #tpu.memory_space<vmem>>, %arg2: memref<16x128xbf16, #tpu.memory_space<vmem>>, %arg3: memref<1x128xf32, #tpu.memory_space<vmem>>, %arg4: memref<128x128xbf16, #tpu.memory_space<vmem>>, %arg5: memref<1x128xf32, #tpu.memory_space<vmem>>, %arg6: memref<128x128xbf16, #tpu.memory_space<vmem>>, %arg7: memref<1x128xf32, #tpu.memory_space<vmem>>, %arg8: memref<8x128xf32, #tpu.memory_space<vmem>>) attributes {dimension_semantics = [#tpu.dimension_semantics<parallel>], iteration_bounds = array<i64: 1>, scalar_prefetch = 0 : i64, scratch_operands = 0 : i64, tpu.core_type = #tpu.core_type<tc>, window_params = [{transform_indices = @transform_0, window_bounds = array<i64: 8, 16>}, {pipeline_mode = #tpu.pipeline_mode<synchronous>, transform_indices = @transform_1, window_bounds = array<i64: 16, 128>}, {pipeline_mode = #tpu.pipeline_mode<synchronous>, transform_indices = @transform_2, window_bounds = array<i64: 1, 128>}, {pipeline_mode = #tpu.pipeline_mode<synchronous>, transform_indices = @transform_3, window_bounds = array<i64: 128, 128>}, {pipeline_mode = #tpu.pipeline_mode<synchronous>, transform_indices = @transform_4, window_bounds = array<i64: 1, 128>}, {pipeline_mode = #tpu.pipeline_mode<synchronous>, transform_indices = @transform_5, window_bounds = array<i64: 128, 128>}, {pipeline_mode = #tpu.pipeline_mode<synchronous>, transform_indices = @transform_6, window_bounds = array<i64: 1, 128>}, {transform_indices = @transform_7, window_bounds = array<i64: 8, 128>}]} {
    %c0 = arith.constant 0 : index
    %c0_0 = arith.constant 0 : index
    %0 = vector.load %arg1[%c0, %c0_0] : memref<8x16xbf16, #tpu.memory_space<vmem>>, vector<8x16xbf16>
    %c0_1 = arith.constant 0 : index
    %c0_2 = arith.constant 0 : index
    %1 = vector.load %arg2[%c0_1, %c0_2] : memref<16x128xbf16, #tpu.memory_space<vmem>>, vector<16x128xbf16>
    %cst = arith.constant dense<0.000000e+00> : vector<8x128xf32>
    %2 = tpu.matmul %0, %1, %cst {dimension_numbers = #tpu.dot_dimension_numbers<[1], [0], [0], [1], [0, 0, 1, 1], [], []>} : vector<8x16xbf16>, vector<16x128xbf16>, vector<8x128xf32> -> vector<8x128xf32>
    %c0_3 = arith.constant 0 : index
    %c0_4 = arith.constant 0 : index
    %3 = vector.load %arg3[%c0_3, %c0_4] : memref<1x128xf32, #tpu.memory_space<vmem>>, vector<1x128xf32>
    %4 = vector.broadcast %3 : vector<1x128xf32> to vector<8x128xf32>
    %5 = arith.addf %2, %4 : vector<8x128xf32>
    %6 = math.tanh %5 : vector<8x128xf32>
    %7 = arith.truncf %6 : vector<8x128xf32> to vector<8x128xbf16>
    %c0_5 = arith.constant 0 : index
    %c0_6 = arith.constant 0 : index
    %8 = vector.load %arg4[%c0_5, %c0_6] : memref<128x128xbf16, #tpu.memory_space<vmem>>, vector<128x128xbf16>
    %cst_7 = arith.constant dense<0.000000e+00> : vector<8x128xf32>
    %9 = tpu.matmul %7, %8, %cst_7 {dimension_numbers = #tpu.dot_dimension_numbers<[1], [0], [0], [1], [0, 0, 1, 1], [], []>} : vector<8x128xbf16>, vector<128x128xbf16>, vector<8x128xf32> -> vector<8x128xf32>
    %c0_8 = arith.constant 0 : index
    %c0_9 = arith.constant 0 : index
    %10 = vector.load %arg5[%c0_8, %c0_9] : memref<1x128xf32, #tpu.memory_space<vmem>>, vector<1x128xf32>
    %11 = vector.broadcast %10 : vector<1x128xf32> to vector<8x128xf32>
    %12 = arith.addf %9, %11 : vector<8x128xf32>
    %13 = math.tanh %12 : vector<8x128xf32>
    %14 = arith.truncf %13 : vector<8x128xf32> to vector<8x128xbf16>
    %c0_10 = arith.constant 0 : index
    %c0_11 = arith.constant 0 : index
    %15 = vector.load %arg6[%c0_10, %c0_11] : memref<128x128xbf16, #tpu.memory_space<vmem>>, vector<128x128xbf16>
    %cst_12 = arith.constant dense<0.000000e+00> : vector<8x128xf32>
    %16 = tpu.matmul %14, %15, %cst_12 {dimension_numbers = #tpu.dot_dimension_numbers<[1], [0], [0], [1], [0, 0, 1, 1], [], []>} : vector<8x128xbf16>, vector<128x128xbf16>, vector<8x128xf32> -> vector<8x128xf32>
    %c0_13 = arith.constant 0 : index
    %c0_14 = arith.constant 0 : index
    %17 = vector.load %arg7[%c0_13, %c0_14] : memref<1x128xf32, #tpu.memory_space<vmem>>, vector<1x128xf32>
    %18 = vector.broadcast %17 : vector<1x128xf32> to vector<8x128xf32>
    %19 = arith.addf %16, %18 : vector<8x128xf32>
    %c0_15 = arith.constant 0 : index
    %c0_16 = arith.constant 0 : index
    %20 = vector.load %arg8[%c0_15, %c0_16] : memref<8x128xf32, #tpu.memory_space<vmem>>, vector<8x128xf32>
    tpu.vector_store %arg8[%c0_15, %c0_16], %19 {strides = array<i32>} : memref<8x128xf32, #tpu.memory_space<vmem>>, vector<8x128xf32>,
    return
  }
  func.func @transform_0(%arg0: i32) -> (i32, i32) {
    %c0_i32 = arith.constant 0 : i32
    %c0_i32_0 = arith.constant 0 : i32
    return %arg0, %c0_i32 : i32, i32
  }
  func.func @transform_1(%arg0: i32) -> (i32, i32) {
    %c0_i32 = arith.constant 0 : i32
    %c0_i32_0 = arith.constant 0 : i32
    %c0_i32_1 = arith.constant 0 : i32
    return %c0_i32, %c0_i32_0 : i32, i32
  }
  func.func @transform_2(%arg0: i32) -> (i32, i32) {
    %c0_i32 = arith.constant 0 : i32
    %c0_i32_0 = arith.constant 0 : i32
    %c0_i32_1 = arith.constant 0 : i32
    return %c0_i32, %c0_i32_0 : i32, i32
  }
  func.func @transform_3(%arg0: i32) -> (i32, i32) {
    %c0_i32 = arith.constant 0 : i32
    %c0_i32_0 = arith.constant 0 : i32
    %c0_i32_1 = arith.constant 0 : i32
    return %c0_i32, %c0_i32_0 : i32, i32
  }
  func.func @transform_4(%arg0: i32) -> (i32, i32) {
    %c0_i32 = arith.constant 0 : i32
    %c0_i32_0 = arith.constant 0 : i32
    %c0_i32_1 = arith.constant 0 : i32
    return %c0_i32, %c0_i32_0 : i32, i32
  }
  func.func @transform_5(%arg0: i32) -> (i32, i32) {
    %c0_i32 = arith.constant 0 : i32
    %c0_i32_0 = arith.constant 0 : i32
    %c0_i32_1 = arith.constant 0 : i32
    return %c0_i32, %c0_i32_0 : i32, i32
  }
  func.func @transform_6(%arg0: i32) -> (i32, i32) {
    %c0_i32 = arith.constant 0 : i32
    %c0_i32_0 = arith.constant 0 : i32
    %c0_i32_1 = arith.constant 0 : i32
    return %c0_i32, %c0_i32_0 : i32, i32
  }
  func.func @transform_7(%arg0: i32) -> (i32, i32) {
    %c0_i32 = arith.constant 0 : i32
    %c0_i32_0 = arith.constant 0 : i32
    return %arg0, %c0_i32 : i32, i32
  }
}

</mosaic_0001>

<llo_original>
// kernel: feedforward_critic.1
$region0: #{feedforward_critic.1}
  #allocation0 [shape = 'u32[]', space=smem, size = 0x4, offset = 0x4, fixed_abs, tag = 'smem constant byte address 0x4 - core index']
  #allocation1 [shape = 'u32[144,128]{1,0:T(1,128)}', space=vmem, size = 0x12000, scoped, tag = 'internal scratch']
  %s0 = inlined_call_operand.vmem [shape: bf16[8,16], index: 0, kind: input, shape index: {}]
  %s1 = inlined_call_operand.vmem [shape: bf16[16,128], index: 1, kind: input, shape index: {}]
  %s2 = inlined_call_operand.vmem [shape: f32[1,128], index: 2, kind: input, shape index: {}]
  %s3 = inlined_call_operand.vmem [shape: bf16[128,128], index: 3, kind: input, shape index: {}]
  %s4 = inlined_call_operand.vmem [shape: f32[1,128], index: 4, kind: input, shape index: {}]
  %s5 = inlined_call_operand.vmem [shape: bf16[128,128], index: 5, kind: input, shape index: {}]
  %s6 = inlined_call_operand.vmem [shape: f32[1,128], index: 6, kind: input, shape index: {}]
  %s7 = inlined_call_operand.vmem [shape: f32[8,128], index: 7, kind: output, shape index: {}]
  %s8 = sld [smem:[#allocation0]]
  $region38: #{feedforward_critic.1} parent=0
    _
  %s10 = ssub.s32 1, %s8
  %s11 = scalar_select 0, %s10, %s8
  // Predicated region
  $region2: #{feedforward_critic.1} parent=0 // pred_check
    _
  $region3: #{feedforward_critic.1} parent=0 // pred_check_branch
    %13 = sbr.rel (0) target = $region5
  $region4: #{feedforward_critic.1} parent=0 // pred_region
    _
  $region5: #{feedforward_critic.1} parent=0 // pred_fallthru
    _
  // Predicated region
  $region6: #{feedforward_critic.1} parent=0 // pred_check
    _
  $region7: #{feedforward_critic.1} parent=0 // pred_check_branch
    %15 = sbr.rel (0) target = $region9
  $region8: #{feedforward_critic.1} parent=0 // pred_region
    _
  $region9: #{feedforward_critic.1} parent=0 // pred_fallthru
    _
  // Predicated region
  $region10: #{feedforward_critic.1} parent=0 // pred_check
    _
  $region11: #{feedforward_critic.1} parent=0 // pred_check_branch
    %17 = sbr.rel (0) target = $region13
  $region12: #{feedforward_critic.1} parent=0 // pred_region
    _
  $region13: #{feedforward_critic.1} parent=0 // pred_fallthru
    _
  // Predicated region
  $region14: #{feedforward_critic.1} parent=0 // pred_check
    _
  $region15: #{feedforward_critic.1} parent=0 // pred_check_branch
    %19 = sbr.rel (0) target = $region17
  $region16: #{feedforward_critic.1} parent=0 // pred_region
    _
  $region17: #{feedforward_critic.1} parent=0 // pred_fallthru
    _
  // Predicated region
  $region18: #{feedforward_critic.1} parent=0 // pred_check
    _
  $region19: #{feedforward_critic.1} parent=0 // pred_check_branch
    %21 = sbr.rel (0) target = $region21
  $region20: #{feedforward_critic.1} parent=0 // pred_region
    _
  $region21: #{feedforward_critic.1} parent=0 // pred_fallthru
    _
  // Predicated region
  $region22: #{feedforward_critic.1} parent=0 // pred_check
    _
  $region23: #{feedforward_critic.1} parent=0 // pred_check_branch
    %23 = sbr.rel (0) target = $region25
  $region24: #{feedforward_critic.1} parent=0 // pred_region
    _
  $region25: #{feedforward_critic.1} parent=0 // pred_fallthru
    _
  // Predicated region
  $region26: #{feedforward_critic.1} parent=0 // pred_check
    _
  $region27: #{feedforward_critic.1} parent=0 // pred_check_branch
    %25 = sbr.rel (0) target = $region29
  $region28: #{feedforward_critic.1} parent=0 // pred_region
    _
  $region29: #{feedforward_critic.1} parent=0 // pred_fallthru
    _
  %v27 = vld [vmem:[%s0] sm:$0xf]
  %v28 = vld [vmem:[%s1] sm:$0xf]
  %v29 = vld [vmem:[%s1 + $0x4] sm:$0xf]
  %v30 = vld [vmem:[%s2] sm:$0x1]
  %v32 = vlaneseq
  %v33 = vshrl.u32 %v32, 7
  %v34 = vsub.s32 0, %v33
  %v35 = vrot.slane %v30, %v34
  %v39 = vunpack.c.l.b16 %v28
  %v40 = vunpack.c.l.b16 %v29
  %v41 = vpack.c.b16 %v40, %v39
  %vm43 = vcmask 130048
  %v45 = vsel %vm43, %v27, 0
  %47 = vmatprep.subr.bf16.mxu0 0
  %48 = vmatpush1.bf16.msra.mxu0 %v41
  %49 = vmatprep.subr.bf16.mxu0 0
  %50 = vmatpush1.bf16.msra.mxu0 0
  %51 = vmatprep.subr.bf16.mxu0 0
  %52 = vmatpush1.bf16.msra.mxu0 0
  %53 = vmatprep.subr.bf16.mxu0 0
  %54 = vmatpush1.bf16.msra.mxu0 0
  %55 = vmatprep.subr.bf16.mxu0 0
  %56 = vmatpush1.bf16.msra.mxu0 0
  %57 = vmatprep.subr.bf16.mxu0 0
  %58 = vmatpush1.bf16.msra.mxu0 0
  %59 = vmatprep.subr.bf16.mxu0 0
  %60 = vmatpush1.bf16.msra.mxu0 0
  %61 = vmatprep.subr.bf16.mxu0 0
  %62 = vmatpush1.bf16.msra.mxu0 0
  %63 = vmatprep.subr.bf16.mxu0 0
  %64 = vmatpush1.bf16.msra.mxu0 0
  %65 = vmatprep.subr.bf16.mxu0 0
  %66 = vmatpush1.bf16.msra.mxu0 0
  %67 = vmatprep.subr.bf16.mxu0 0
  %68 = vmatpush1.bf16.msra.mxu0 0
  %69 = vmatprep.subr.bf16.mxu0 0
  %70 = vmatpush1.bf16.msra.mxu0 0
  %71 = vmatprep.subr.bf16.mxu0 0
  %72 = vmatpush1.bf16.msra.mxu0 0
  %73 = vmatprep.subr.bf16.mxu0 0
  %74 = vmatpush1.bf16.msra.mxu0 0
  %75 = vmatprep.subr.bf16.mxu0 0
  %76 = vmatpush1.bf16.msra.mxu0 0
  %77 = vmatprep.subr.bf16.mxu0 0
  %78 = vmatpush1.bf16.msra.mxu0 0
  %79 = vmatprep.mubr.bf16.mxu0 0
  %80 = vmatmul.mubr.bf16.gmra.mrb[0].mxu0 %v45
  %v81 = vpop.f32.mrb[0].mxu0
  %v82 = vadd.f32 %v35, %v81
  %v83 = vpop.f32.mrb[0].mxu0
  %v84 = vpop.f32.mrb[0].mxu0
  %v85 = vpop.f32.mrb[0].mxu0
  %86 = vdwg.mxu0
  %v87 = vtanh.pop %v82
  %v88 = vpack.c.bf16 %v87, %v87
  %v89 = vld [vmem:[%s3] sm:$0xf]
  %v90 = vld [vmem:[%s3 + $0x4] sm:$0xf]
  %v91 = vld [vmem:[%s3 + $0x8] sm:$0xf]
  %v92 = vld [vmem:[%s3 + $0xc] sm:$0xf]
  %v93 = vld [vmem:[%s3 + $0x10] sm:$0xf]
  %v94 = vld [vmem:[%s3 + $0x14] sm:$0xf]
  %v95 = vld [vmem:[%s3 + $0x18] sm:$0xf]
  %v96 = vld [vmem:[%s3 + $0x1c] sm:$0xf]
  %v97 = vld [vmem:[%s3 + $0x20] sm:$0xf]
  %v98 = vld [vmem:[%s3 + $0x24] sm:$0xf]
  %v99 = vld [vmem:[%s3 + $0x28] sm:$0xf]
  %v100 = vld [vmem:[%s3 + $0x2c] sm:$0xf]
  %v101 = vld [vmem:[%s3 + $0x30] sm:$0xf]
  %v102 = vld [vmem:[%s3 + $0x34] sm:$0xf]
  %v103 = vld [vmem:[%s3 + $0x38] sm:$0xf]
  %v104 = vld [vmem:[%s3 + $0x3c] sm:$0xf]
  %v105 = vld [vmem:[%s4] sm:$0x1]
  %v107 = vlaneseq
  %v108 = vshrl.u32 %v107, 7
  %v109 = vsub.s32 0, %v108
  %v110 = vrot.slane %v105, %v109
  %v128 = vunpack.c.l.b16 %v89
  %v129 = vunpack.c.l.b16 %v90
  %v130 = vunpack.c.l.b16 %v91
  %v131 = vunpack.c.l.b16 %v92
  %v132 = vunpack.c.l.b16 %v93
  %v133 = vunpack.c.l.b16 %v94
  %v134 = vunpack.c.l.b16 %v95
  %v135 = vunpack.c.l.b16 %v96
  %v136 = vunpack.c.l.b16 %v97
  %v137 = vunpack.c.l.b16 %v98
  %v138 = vunpack.c.l.b16 %v99
  %v139 = vunpack.c.l.b16 %v100
  %v140 = vunpack.c.l.b16 %v101
  %v141 = vunpack.c.l.b16 %v102
  %v142 = vunpack.c.l.b16 %v103
  %v143 = vunpack.c.l.b16 %v104
  %v144 = vpack.c.b16 %v129, %v128
  %v145 = vpack.c.b16 %v131, %v130
  %v146 = vpack.c.b16 %v133, %v132
  %v147 = vpack.c.b16 %v135, %v134
  %v148 = vpack.c.b16 %v137, %v136
  %v149 = vpack.c.b16 %v139, %v138
  %v150 = vpack.c.b16 %v141, %v140
  %v151 = vpack.c.b16 %v143, %v142
  %160 = vmatprep.subr.bf16.mxu0 0
  %161 = vmatpush1.bf16.msra.mxu0 %v144
  %162 = vmatprep.subr.bf16.mxu0 0
  %163 = vmatpush1.bf16.msra.mxu0 %v145
  %164 = vmatprep.subr.bf16.mxu0 0
  %165 = vmatpush1.bf16.msra.mxu0 %v146
  %166 = vmatprep.subr.bf16.mxu0 0
  %167 = vmatpush1.bf16.msra.mxu0 %v147
  %168 = vmatprep.subr.bf16.mxu0 0
  %169 = vmatpush1.bf16.msra.mxu0 %v148
  %170 = vmatprep.subr.bf16.mxu0 0
  %171 = vmatpush1.bf16.msra.mxu0 %v149
  %172 = vmatprep.subr.bf16.mxu0 0
  %173 = vmatpush1.bf16.msra.mxu0 %v150
  %174 = vmatprep.subr.bf16.mxu0 0
  %175 = vmatpush1.bf16.msra.mxu0 %v151
  %176 = vmatprep.subr.bf16.mxu0 0
  %177 = vmatpush1.bf16.msra.mxu0 0
  %178 = vmatprep.subr.bf16.mxu0 0
  %179 = vmatpush1.bf16.msra.mxu0 0
  %180 = vmatprep.subr.bf16.mxu0 0
  %181 = vmatpush1.bf16.msra.mxu0 0
  %182 = vmatprep.subr.bf16.mxu0 0
  %183 = vmatpush1.bf16.msra.mxu0 0
  %184 = vmatprep.subr.bf16.mxu0 0
  %185 = vmatpush1.bf16.msra.mxu0 0
  %186 = vmatprep.subr.bf16.mxu0 0
  %187 = vmatpush1.bf16.msra.mxu0 0
  %188 = vmatprep.subr.bf16.mxu0 0
  %189 = vmatpush1.bf16.msra.mxu0 0
  %190 = vmatprep.subr.bf16.mxu0 0
  %191 = vmatpush1.bf16.msra.mxu0 0
  %192 = vmatprep.mubr.bf16.mxu0 0
  %193 = vmatmul.mubr.bf16.gmra.mrb[0].mxu0 %v88
  %v194 = vpop.f32.mrb[0].mxu0
  %v195 = vadd.f32 %v110, %v194
  %v196 = vpop.f32.mrb[0].mxu0
  %v197 = vpop.f32.mrb[0].mxu0
  %v198 = vpop.f32.mrb[0].mxu0
  %199 = vdwg.mxu0
  %v200 = vtanh.pop %v195
  %v201 = vpack.c.bf16 %v200, %v200
  %v202 = vld [vmem:[%s5] sm:$0xf]
  %v203 = vld [vmem:[%s5 + $0x4] sm:$0xf]
  %v204 = vld [vmem:[%s5 + $0x8] sm:$0xf]
  %v205 = vld [vmem:[%s5 + $0xc] sm:$0xf]
  %v206 = vld [vmem:[%s5 + $0x10] sm:$0xf]
  %v207 = vld [vmem:[%s5 + $0x14] sm:$0xf]
  %v208 = vld [vmem:[%s5 + $0x18] sm:$0xf]
  %v209 = vld [vmem:[%s5 + $0x1c] sm:$0xf]
  %v210 = vld [vmem:[%s5 + $0x20] sm:$0xf]
  %v211 = vld [vmem:[%s5 + $0x24] sm:$0xf]
  %v212 = vld [vmem:[%s5 + $0x28] sm:$0xf]
  %v213 = vld [vmem:[%s5 + $0x2c] sm:$0xf]
  %v214 = vld [vmem:[%s5 + $0x30] sm:$0xf]
  %v215 = vld [vmem:[%s5 + $0x34] sm:$0xf]
  %v216 = vld [vmem:[%s5 + $0x38] sm:$0xf]
  %v217 = vld [vmem:[%s5 + $0x3c] sm:$0xf]
  %v218 = vld [vmem:[%s6] sm:$0x1]
  %v220 = vlaneseq
  %v221 = vshrl.u32 %v220, 7
  %v222 = vsub.s32 0, %v221
  %v223 = vrot.slane %v218, %v222
  %v241 = vunpack.c.l.b16 %v202
  %v242 = vunpack.c.l.b16 %v203
  %v243 = vunpack.c.l.b16 %v204
  %v244 = vunpack.c.l.b16 %v205
  %v245 = vunpack.c.l.b16 %v206
  %v246 = vunpack.c.l.b16 %v207
  %v247 = vunpack.c.l.b16 %v208
  %v248 = vunpack.c.l.b16 %v209
  %v249 = vunpack.c.l.b16 %v210
  %v250 = vunpack.c.l.b16 %v211
  %v251 = vunpack.c.l.b16 %v212
  %v252 = vunpack.c.l.b16 %v213
  %v253 = vunpack.c.l.b16 %v214
  %v254 = vunpack.c.l.b16 %v215
  %v255 = vunpack.c.l.b16 %v216
  %v256 = vunpack.c.l.b16 %v217
  %v257 = vpack.c.b16 %v242, %v241
  %v258 = vpack.c.b16 %v244, %v243
  %v259 = vpack.c.b16 %v246, %v245
  %v260 = vpack.c.b16 %v248, %v247
  %v261 = vpack.c.b16 %v250, %v249
  %v262 = vpack.c.b16 %v252, %v251
  %v263 = vpack.c.b16 %v254, %v253
  %v264 = vpack.c.b16 %v256, %v255
  %273 = vmatprep.subr.bf16.mxu0 0
  %274 = vmatpush1.bf16.msra.mxu0 %v257
  %275 = vmatprep.subr.bf16.mxu0 0
  %276 = vmatpush1.bf16.msra.mxu0 %v258
  %277 = vmatprep.subr.bf16.mxu0 0
  %278 = vmatpush1.bf16.msra.mxu0 %v259
  %279 = vmatprep.subr.bf16.mxu0 0
  %280 = vmatpush1.bf16.msra.mxu0 %v260
  %281 = vmatprep.subr.bf16.mxu0 0
  %282 = vmatpush1.bf16.msra.mxu0 %v261
  %283 = vmatprep.subr.bf16.mxu0 0
  %284 = vmatpush1.bf16.msra.mxu0 %v262
  %285 = vmatprep.subr.bf16.mxu0 0
  %286 = vmatpush1.bf16.msra.mxu0 %v263
  %287 = vmatprep.subr.bf16.mxu0 0
  %288 = vmatpush1.bf16.msra.mxu0 %v264
  %289 = vmatprep.subr.bf16.mxu0 0
  %290 = vmatpush1.bf16.msra.mxu0 0
  %291 = vmatprep.subr.bf16.mxu0 0
  %292 = vmatpush1.bf16.msra.mxu0 0
  %293 = vmatprep.subr.bf16.mxu0 0
  %294 = vmatpush1.bf16.msra.mxu0 0
  %295 = vmatprep.subr.bf16.mxu0 0
  %296 = vmatpush1.bf16.msra.mxu0 0
  %297 = vmatprep.subr.bf16.mxu0 0
  %298 = vmatpush1.bf16.msra.mxu0 0
  %299 = vmatprep.subr.bf16.mxu0 0
  %300 = vmatpush1.bf16.msra.mxu0 0
  %301 = vmatprep.subr.bf16.mxu0 0
  %302 = vmatpush1.bf16.msra.mxu0 0
  %303 = vmatprep.subr.bf16.mxu0 0
  %304 = vmatpush1.bf16.msra.mxu0 0
  %305 = vmatprep.mubr.bf16.mxu0 0
  %306 = vmatmul.mubr.bf16.gmra.mrb[0].mxu0 %v201
  %v307 = vpop.f32.mrb[0].mxu0
  %v308 = vadd.f32 %v223, %v307
  %v309 = vpop.f32.mrb[0].mxu0
  %v310 = vpop.f32.mrb[0].mxu0
  %v311 = vpop.f32.mrb[0].mxu0
  %312 = vdwg.mxu0
  %313 = vst [vmem:[%s7] sm:$0xff] %v308
  // Predicated region
  $region30: #{feedforward_critic.1} parent=0 // pred_check
    _
  $region31: #{feedforward_critic.1} parent=0 // pred_check_branch
    %315 = sbr.rel (0) target = $region33
  $region32: #{feedforward_critic.1} parent=0 // pred_region
    _
  $region33: #{feedforward_critic.1} parent=0 // pred_fallthru
    _
  // Predicated region
  $region34: #{feedforward_critic.1} parent=0 // pred_check
    _
  $region35: #{feedforward_critic.1} parent=0 // pred_check_branch
    %317 = sbr.rel (0) target = $region37
  $region36: #{feedforward_critic.1} parent=0 // pred_region
    _
  $region37: #{feedforward_critic.1} parent=0 // pred_fallthru
    _

</llo_original>
